<compile_context>
chip_gen: v7x
topology: tpu7x:2x2x1
jax: 0.10.0
libtpu: 0.0.40
codegen_flags: <defaults>
</compile_context>

<pallas_src>
import functools

import jax
import jax.numpy as jnp
from jax.experimental import pallas as pl
from jax.experimental.pallas import tpu as pltpu


def _cdiv(a, b):
    return (a + b - 1) // b


def _round_up(x, m):
    return _cdiv(x, m) * m


def _balanced_tile(dim, cap, align):
    """Largest tile <= cap that balances the padded dim across tiles."""
    dim_a = _round_up(max(dim, 1), align)
    if dim_a <= cap:
        return dim_a
    n_tiles = _cdiv(dim_a, cap)
    return _round_up(_cdiv(dim_a, n_tiles), align)


# ----------------------------------------------------------------------------
# Kernel
# ----------------------------------------------------------------------------
def _multi_lora_kernel(idx_ref, x_ref, w_ref, bias_ref, mid_ref, bexp_ref,
                       o_ref, acc_ref, *, tk, x_resident):
    del idx_ref  # only consumed by the B index_map (scalar prefetch)
    k = pl.program_id(2)

    @pl.when(k == 0)
    def _():
        acc_ref[...] = jnp.zeros_like(acc_ref)

    if x_resident:
        # x block is the full-K panel for this i tile; slice the tk chunk.
        off = pl.multiple_of(k * tk, tk)
        x = x_ref[:, pl.ds(off, tk)]                       # (tm, tk)
    else:
        x = x_ref[...]                                     # (tm, tk)

    # Single hot-loop matmul, canonical (tm,tk)x(tk,tn), f32 accumulation.
    acc_ref[...] += jnp.dot(x, w_ref[...], preferred_element_type=jnp.float32)

    @pl.when(k == pl.num_programs(2) - 1)
    def _():
        # Rank-r LoRA up-projection (mid already includes lora_alpha/r scaling),
        # bias add, single cast, lane-dense store.
        lora = jnp.dot(mid_ref[...], bexp_ref[...],
                       preferred_element_type=jnp.float32)  # (tm, tn)
        o_ref[...] = (acc_ref[...] + bias_ref[...] + lora).astype(o_ref.dtype)


# ----------------------------------------------------------------------------
# One-time parameter preparation ("weight load time")
# ----------------------------------------------------------------------------
def prepare_params(w, b, a_all, b_all, *, lora_alpha=8,
                   compute_dtype=jnp.bfloat16, tn_max=512, tk_max=512):
    """Pad / transpose / cast the frozen weights once (not per forward call).

    w: (N, K)  b: (N,)  a_all: (E, r, K)  b_all: (E, N, r)
    """
    N, K = w.shape
    E, r, _ = a_all.shape
    tn = _balanced_tile(N, tn_max, 128)
    tk = _balanced_tile(K, tk_max, 128)
    Np = _round_up(N, tn)
    Kp = _round_up(K, tk)
    rp = _round_up(r, 8)
    scaling = float(lora_alpha) / float(r)

    # Canonical (K, N) layout for the base matmul, padded + cast once.
    w_t = jnp.pad(w.T.astype(compute_dtype), ((0, Kp - K), (0, Np - N)))
    bias = jnp.pad(b.astype(jnp.float32), (0, Np - N)).reshape(1, Np)
    # Fold scaling into A once; keep native (E, r, K) layout (used in wrapper).
    a_scaled = (a_all * scaling).astype(compute_dtype)
    # Stacked per-expert B, pre-transposed to (E, rp, Np) for the epilogue.
    b_t = jnp.pad(jnp.transpose(b_all, (0, 2, 1)).astype(compute_dtype),
                  ((0, 0), (0, rp - r), (0, Np - N)))

    return dict(w_t=w_t, bias=bias, a_scaled=a_scaled, b_t=b_t,
                N=N, K=K, r=r, rp=rp, tn=tn, tk=tk, Np=Np, Kp=Kp,
                compute_dtype=compute_dtype)


# ----------------------------------------------------------------------------
# Forward
# ----------------------------------------------------------------------------
def multi_lora_forward(params, x, active_idx, *, tm_max=1024,
                       x_panel_budget=12 * 2**20, vmem_budget=40 * 2**20):
    cd = params["compute_dtype"]
    N, K, r, rp = params["N"], params["K"], params["r"], params["rp"]
    tn, tk, Np, Kp = params["tn"], params["tk"], params["Np"], params["Kp"]

    orig_shape = x.shape
    out_dtype = x.dtype
    x2d = x.reshape(-1, K)
    M = x2d.shape[0]

    in_esz = jnp.dtype(cd).itemsize
    out_esz = jnp.dtype(out_dtype).itemsize

    tm = _balanced_tile(M, tm_max, 8)
    # Keep x K-resident per i tile unless the panel would blow the budget.
    x_resident = (tm * Kp * in_esz * 2) <= x_panel_budget

    def vmem_est(tm_, x_res):
        x_b = tm_ * (Kp if x_res else tk) * in_esz * 2
        return (x_b + tk * tn * in_esz * 2 + 8 * tn * 4 * 2
                + tm_ * rp * in_esz * 2 + rp * tn * in_esz * 2
                + tm_ * tn * out_esz * 2 + tm_ * tn * 4)

    # v7x has 64 MiB VMEM per TensorCore; keep the estimate well under it.
    while vmem_est(tm, x_resident) > vmem_budget and (x_resident or tm > 8):
        if x_resident:
            x_resident = False
        else:
            tm = max(8, _round_up(tm // 2, 8))

    Mp = _round_up(M, tm)
    vmem_limit = int(min(56 * 2**20,
                         max(32 * 2**20, int(vmem_est(tm, x_resident) * 1.5))))

    idx_scalar = jnp.asarray(active_idx, jnp.int32)
    x_c = x2d.astype(cd)
    x_p = jnp.pad(x_c, ((0, Mp - M), (0, Kp - K)))

    # LoRA down-projection hoisted out of the kernel: tiny (M, r) matmul on the
    # single active expert's pre-scaled A (gathered, not padded per-expert).
    a_act = jax.lax.dynamic_index_in_dim(params["a_scaled"], idx_scalar,
                                         axis=0, keepdims=False)     # (r, K)
    mid = jnp.dot(x_c, a_act.T,
                  preferred_element_type=jnp.float32).astype(cd)     # (M, r)
    mid_p = jnp.pad(mid, ((0, Mp - M), (0, rp - r)))

    idx = idx_scalar.reshape((1,))
    grid = (Mp // tm, Np // tn, Kp // tk)
    kernel = functools.partial(_multi_lora_kernel, tk=tk, x_resident=x_resident)

    if x_resident:
        x_spec = pl.BlockSpec((tm, Kp), lambda i, j, k, idx_ref: (i, 0))
    else:
        x_spec = pl.BlockSpec((tm, tk), lambda i, j, k, idx_ref: (i, k))

    out_p = pl.pallas_call(
        kernel,
        out_shape=jax.ShapeDtypeStruct((Mp, Np), out_dtype),
        grid_spec=pltpu.PrefetchScalarGridSpec(
            num_scalar_prefetch=1,
            grid=grid,
            in_specs=[
                x_spec,                                                     # x
                pl.BlockSpec((tk, tn), lambda i, j, k, idx_ref: (k, j)),    # W.T
                pl.BlockSpec((1, tn), lambda i, j, k, idx_ref: (0, j)),     # bias
                pl.BlockSpec((tm, rp), lambda i, j, k, idx_ref: (i, 0)),    # mid
                # Active expert's B.T, selected via scalar-prefetched index.
                pl.BlockSpec((pl.Squeezed(), rp, tn),
                             lambda i, j, k, idx_ref: (idx_ref[0], 0, j)),
            ],
            out_specs=pl.BlockSpec((tm, tn), lambda i, j, k, idx_ref: (i, j)),
            scratch_shapes=[pltpu.VMEM((tm, tn), jnp.float32)],
        ),
        compiler_params=pltpu.CompilerParams(
            dimension_semantics=("parallel", "parallel", "arbitrary"),
            vmem_limit_bytes=vmem_limit),
    )(idx, x_p, params["w_t"], params["bias"], mid_p, params["b_t"])

    out = out_p[:M, :N]
    return out.reshape(*orig_shape[:-1], N)


# ----------------------------------------------------------------------------
# References & tests
# ----------------------------------------------------------------------------
def _reference_f32(x, w, b, a_all, b_all, idx, lora_alpha):
    r = a_all.shape[1]
    s = lora_alpha / r
    return x @ w.T + b + s * ((x @ a_all[idx].T) @ b_all[idx].T)


def _reference_mixed(x, w, b, a_all, b_all, idx, lora_alpha, cd):
    """Same math with operands cast to the MXU compute dtype, f32 accumulation."""
    r = a_all.shape[1]
    s = lora_alpha / r
    K = x.shape[-1]
    xc = x.reshape(-1, K).astype(cd)
    base = jnp.dot(xc, w.astype(cd).T, preferred_element_type=jnp.float32)
    a = (a_all[idx] * s).astype(cd)
    mid = jnp.dot(xc, a.T, preferred_element_type=jnp.float32).astype(cd)
    lora = jnp.dot(mid, b_all[idx].astype(cd).T,
                   preferred_element_type=jnp.float32)
    y = base + b.astype(jnp.float32) + lora
    return y.reshape(*x.shape[:-1], w.shape[0]).astype(x.dtype)


def _check(name, out, ref, atol, rtol):
    err = float(jnp.max(jnp.abs(out - ref)))
    assert bool(jnp.allclose(out, ref, atol=atol, rtol=rtol)), (
        f"{name}: max_abs_err={err}")


def _make_inputs(key, batch, seq, K, N, E, r):
    kx, kw, kb, ka, kB = jax.random.split(key, 5)
    x = jax.random.normal(kx, (batch, seq, K), jnp.float32)
    w = jax.random.normal(kw, (N, K), jnp.float32) * 0.05
    b = jax.random.normal(kb, (N,), jnp.float32) * 0.01
    a_all = jax.random.normal(ka, (E, r, K), jnp.float32) * 0.1
    b_all = jax.random.normal(kB, (E, N, r), jnp.float32) * 0.1
    return x, w, b, a_all, b_all


if __name__ == "__main__":
    key = jax.random.PRNGKey(0)
    k1, k2 = jax.random.split(key)
    alpha = 8

    # Case 1: module-scale small config (nn.Linear 32 -> 64, 3 experts, r=4),
    # f32 compute path, single-tile grid.
    x, w, b, a_all, b_all = _make_inputs(k1, batch=2, seq=8, K=32, N=64, E=3, r=4)
    p32 = prepare_params(w, b, a_all, b_all, lora_alpha=alpha,
                         compute_dtype=jnp.float32)
    out = jax.block_until_ready(multi_lora_forward(p32, x, 1))
    assert out.shape == (2, 8, 64)
    _check("case1_f32", out, _reference_f32(x, w, b, a_all, b_all, 1, alpha),
           atol=1e-2, rtol=1e-2)

    # Case 2: larger config, bf16 MXU operands, K-resident x panel, default
    # (balanced) tiles -> single-tile grid.
    x, w, b, a_all, b_all = _make_inputs(k2, batch=4, seq=160, K=512, N=384,
                                         E=3, r=4)
    pbf = prepare_params(w, b, a_all, b_all, lora_alpha=alpha,
                         compute_dtype=jnp.bfloat16)
    out = jax.block_until_ready(multi_lora_forward(pbf, x, 2))
    assert out.shape == (4, 160, 384)
    _check("case2_bf16_vs_mixed", out,
           _reference_mixed(x, w, b, a_all, b_all, 2, alpha, jnp.bfloat16),
           atol=2e-2, rtol=2e-2)
    _check("case2_bf16_vs_f32", out,
           _reference_f32(x, w, b, a_all, b_all, 2, alpha),
           atol=0.15, rtol=0.1)

    # Case 3: same shapes with reduced tile caps to force a (3, 2, 2) grid
    # (exercises K-reduction accumulation, M/N padding, multi-j epilogue).
    pbf_s = prepare_params(w, b, a_all, b_all, lora_alpha=alpha,
                           compute_dtype=jnp.bfloat16, tn_max=256, tk_max=256)
    out = jax.block_until_ready(multi_lora_forward(pbf_s, x, 0, tm_max=256))
    assert out.shape == (4, 160, 384)
    _check("case3_multitile", out,
           _reference_mixed(x, w, b, a_all, b_all, 0, alpha, jnp.bfloat16),
           atol=2e-2, rtol=2e-2)

    print("KERNEL_OK")
</pallas_src>

<mosaic_0001>
module attributes {stable_mosaic.version = 11 : i64} {
  func.func @_multi_lora_kernel(%arg0: i32, %arg1: i32, %arg2: i32, %arg3: memref<1xi32, #tpu.memory_space<smem>>, %arg4: memref<16x128xf32, #tpu.memory_space<vmem>>, %arg5: memref<128x128xf32, #tpu.memory_space<vmem>>, %arg6: memref<1x128xf32, #tpu.memory_space<vmem>>, %arg7: memref<16x8xf32, #tpu.memory_space<vmem>>, %arg8: memref<1x8x128xf32, #tpu.memory_space<vmem>>, %arg9: memref<16x128xf32, #tpu.memory_space<vmem>>, %arg10: memref<16x128xf32, #tpu.memory_space<vmem>>) attributes {dimension_semantics = [#tpu.dimension_semantics<parallel>, #tpu.dimension_semantics<parallel>, #tpu.dimension_semantics<arbitrary>], iteration_bounds = array<i64: 1, 1, 1>, scalar_prefetch = 1 : i64, scratch_operands = 1 : i64, tpu.core_type = #tpu.core_type<tc>, window_params = [{transform_indices = @transform_0, window_bounds = array<i64: 16, 128>}, {transform_indices = @transform_1, window_bounds = array<i64: 128, 128>}, {transform_indices = @transform_2, window_bounds = array<i64: 1, 128>}, {transform_indices = @transform_3, window_bounds = array<i64: 16, 8>}, {transform_indices = @transform_4, window_bounds = array<i64: 1, 8, 128>}, {transform_indices = @transform_5, window_bounds = array<i64: 16, 128>}]} {
    %c0_i32 = arith.constant 0 : i32
    %0 = arith.cmpi eq, %arg2, %c0_i32 : i32
    %1 = arith.extui %0 : i1 to i32
    %c0_i32_0 = arith.constant 0 : i32
    %2 = arith.cmpi ne, %1, %c0_i32_0 : i32
    scf.if %2 {
      %cst_9 = arith.constant 0.000000e+00 : f32
      %15 = vector.broadcast %cst_9 : f32 to vector<16x128xf32>
      %c0_10 = arith.constant 0 : index
      %c0_11 = arith.constant 0 : index
      %16 = vector.load %arg10[%c0_10, %c0_11] : memref<16x128xf32, #tpu.memory_space<vmem>>, vector<16x128xf32>
      tpu.vector_store %arg10[%c0_10, %c0_11], %15 {strides = array<i32>} : memref<16x128xf32, #tpu.memory_space<vmem>>, vector<16x128xf32>,
    } else {
    }
    %c128_i32 = arith.constant 128 : i32
    %3 = arith.muli %arg2, %c128_i32 : i32
    %4 = tpu.assume_multiple %3, 128 : i32
    %c0 = arith.constant 0 : index
    %5 = arith.index_cast %4 : i32 to index
    %6 = vector.load %arg4[%c0, %5] : memref<16x128xf32, #tpu.memory_space<vmem>>, vector<16x128xf32>
    %c0_1 = arith.constant 0 : index
    %c0_2 = arith.constant 0 : index
    %7 = vector.load %arg10[%c0_1, %c0_2] : memref<16x128xf32, #tpu.memory_space<vmem>>, vector<16x128xf32>
    %c0_3 = arith.constant 0 : index
    %c0_4 = arith.constant 0 : index
    %8 = vector.load %arg5[%c0_3, %c0_4] : memref<128x128xf32, #tpu.memory_space<vmem>>, vector<128x128xf32>
    %cst = arith.constant dense<0.000000e+00> : vector<16x128xf32>
    %9 = tpu.matmul %6, %8, %cst {dimension_numbers = #tpu.dot_dimension_numbers<[1], [0], [0], [1], [0, 0, 1, 1], [], []>} : vector<16x128xf32>, vector<128x128xf32>, vector<16x128xf32> -> vector<16x128xf32>
    %10 = arith.addf %7, %9 : vector<16x128xf32>
    %c0_5 = arith.constant 0 : index
    %c0_6 = arith.constant 0 : index
    %11 = vector.load %arg10[%c0_5, %c0_6] : memref<16x128xf32, #tpu.memory_space<vmem>>, vector<16x128xf32>
    tpu.vector_store %arg10[%c0_5, %c0_6], %10 {strides = array<i32>} : memref<16x128xf32, #tpu.memory_space<vmem>>, vector<16x128xf32>,
    %c0_i32_7 = arith.constant 0 : i32
    %12 = arith.cmpi eq, %arg2, %c0_i32_7 : i32
    %13 = arith.extui %12 : i1 to i32
    %c0_i32_8 = arith.constant 0 : i32
    %14 = arith.cmpi ne, %13, %c0_i32_8 : i32
    scf.if %14 {
      %c0_9 = arith.constant 0 : index
      %c0_10 = arith.constant 0 : index
      %15 = vector.load %arg7[%c0_9, %c0_10] : memref<16x8xf32, #tpu.memory_space<vmem>>, vector<16x8xf32>
      %c0_11 = arith.constant 0 : index
      %c0_12 = arith.constant 0 : index
      %c0_13 = arith.constant 0 : index
      %16 = vector.load %arg8[%c0_11, %c0_12, %c0_13] : memref<1x8x128xf32, #tpu.memory_space<vmem>>, vector<1x8x128xf32>
      %17 = vector.shape_cast %16 : vector<1x8x128xf32> to vector<8x128xf32>
      %cst_14 = arith.constant dense<0.000000e+00> : vector<16x128xf32>
      %18 = tpu.matmul %15, %17, %cst_14 {dimension_numbers = #tpu.dot_dimension_numbers<[1], [0], [0], [1], [0, 0, 1, 1], [], []>} : vector<16x8xf32>, vector<8x128xf32>, vector<16x128xf32> -> vector<16x128xf32>
      %c0_15 = arith.constant 0 : index
      %c0_16 = arith.constant 0 : index
      %19 = vector.load %arg10[%c0_15, %c0_16] : memref<16x128xf32, #tpu.memory_space<vmem>>, vector<16x128xf32>
      %c0_17 = arith.constant 0 : index
      %c0_18 = arith.constant 0 : index
      %20 = vector.load %arg6[%c0_17, %c0_18] : memref<1x128xf32, #tpu.memory_space<vmem>>, vector<1x128xf32>
      %21 = vector.broadcast %20 : vector<1x128xf32> to vector<16x128xf32>
      %22 = arith.addf %19, %21 : vector<16x128xf32>
      %23 = arith.addf %22, %18 : vector<16x128xf32>
      %c0_19 = arith.constant 0 : index
      %c0_20 = arith.constant 0 : index
      %24 = vector.load %arg9[%c0_19, %c0_20] : memref<16x128xf32, #tpu.memory_space<vmem>>, vector<16x128xf32>
      tpu.vector_store %arg9[%c0_19, %c0_20], %23 {strides = array<i32>} : memref<16x128xf32, #tpu.memory_space<vmem>>, vector<16x128xf32>,
    } else {
    }
    return
  }
  func.func @transform_0(%arg0: i32, %arg1: i32, %arg2: i32, %arg3: memref<1xi32, #tpu.memory_space<smem>>) -> (i32, i32) {
    %c0_i32 = arith.constant 0 : i32
    %c0_i32_0 = arith.constant 0 : i32
    return %arg0, %c0_i32 : i32, i32
  }
  func.func @transform_1(%arg0: i32, %arg1: i32, %arg2: i32, %arg3: memref<1xi32, #tpu.memory_space<smem>>) -> (i32, i32) {
    %c0_i32 = arith.constant 0 : i32
    return %arg2, %arg1 : i32, i32
  }
  func.func @transform_2(%arg0: i32, %arg1: i32, %arg2: i32, %arg3: memref<1xi32, #tpu.memory_space<smem>>) -> (i32, i32) {
    %c0_i32 = arith.constant 0 : i32
    %c0_i32_0 = arith.constant 0 : i32
    return %c0_i32, %arg1 : i32, i32
  }
  func.func @transform_3(%arg0: i32, %arg1: i32, %arg2: i32, %arg3: memref<1xi32, #tpu.memory_space<smem>>) -> (i32, i32) {
    %c0_i32 = arith.constant 0 : i32
    %c0_i32_0 = arith.constant 0 : i32
    return %arg0, %c0_i32 : i32, i32
  }
  func.func @transform_4(%arg0: i32, %arg1: i32, %arg2: i32, %arg3: memref<1xi32, #tpu.memory_space<smem>>) -> (i32, i32, i32) {
    %c0 = arith.constant 0 : index
    %0 = memref.load %arg3[%c0] : memref<1xi32, #tpu.memory_space<smem>>
    %c0_i32 = arith.constant 0 : i32
    %c0_i32_0 = arith.constant 0 : i32
    return %0, %c0_i32, %arg1 : i32, i32, i32
  }
  func.func @transform_5(%arg0: i32, %arg1: i32, %arg2: i32, %arg3: memref<1xi32, #tpu.memory_space<smem>>) -> (i32, i32) {
    %c0_i32 = arith.constant 0 : i32
    return %arg0, %arg1 : i32, i32
  }
}

</mosaic_0001>

<llo_original>
// kernel: tpu_custom_call.1
$region0: #{tpu_custom_call.1}
  #allocation0 [shape = 'u32[]', space=smem, size = 0x4, offset = 0x4, fixed_abs, tag = 'smem constant byte address 0x4 - core index']
  #allocation1 [shape = 'u32[144,128]{1,0:T(1,128)}', space=vmem, size = 0x12000, scoped, tag = 'internal scratch']
  #allocation2 [shape = 'f32[16,128]{1,0:T(8,128)}', space=vmem, size = 0x2000, scoped, tag = 'scratch operand']
  #allocation3 [shape = 's32[1]{0}', space=sflag, size = 0x4, scoped, tag = 'scoped memory for tpu_custom_call.1']
  #allocation4 [shape = 's32[1]{0:T(128)S(6)}', space=smem, size = 0x200, scoped, tag = 'prefetched SMEM operand 0']
  %s0 = inlined_call_operand.<no memory space> [shape: s32[1], index: 0, kind: input, shape index: {}]
  %s1 = inlined_call_operand.vmem [shape: f32[16,128], index: 1, kind: input, shape index: {}]
  %s2 = inlined_call_operand.hbm [shape: f32[128,128], index: 2, kind: input, shape index: {}]
  %s3 = inlined_call_operand.vmem [shape: f32[1,128], index: 3, kind: input, shape index: {}]
  %s4 = inlined_call_operand.vmem [shape: f32[16,8], index: 4, kind: input, shape index: {}]
  %s5 = inlined_call_operand.vmem [shape: f32[3,8,128], index: 5, kind: input, shape index: {}]
  %s6 = inlined_call_operand.hbm [shape: f32[16,128], index: 6, kind: output, shape index: {}]
  %s7 = sld [smem:[#allocation0]]
  $region42: #{tpu_custom_call.1} parent=0
    _
  %s9 = ssub.s32 1, %s7
  %s10 = scalar_select 0, %s9, %s7
  %11 = sst [smem:[#allocation4]] %s0
  $region1: #{tpu_custom_call.1} parent=0
    #allocation5 [shape = 'u8[65536]{0}', space=vmem, size = 0x10000, scoped, tag = 'input window, operand 2, single buffered']
    #allocation6 [shape = 's32[1]{0}', space=sflag, size = 0x4, scoped, tag = 'scoped memory for tpu_custom_call.1']
    #allocation7 [shape = 's32[1]{0}', space=sflag, size = 0x4, scoped, tag = 'scoped memory for tpu_custom_call.1']
    #allocation8 [shape = 'u8[8192]{0}', space=vmem, size = 0x2000, scoped, tag = 'output window, operand 0, single buffered']
    %12 = vsyncpa [#allocation6], 0
    %13 = vsyncpa [#allocation7], 0
    // Predicated region
    $region2: #{tpu_custom_call.1} parent=1 // pred_check
      _
    $region3: #{tpu_custom_call.1} parent=1 // pred_check_branch
      %15 = sbr.rel (0) target = $region5
    $region4: #{tpu_custom_call.1} parent=1 // pred_region
      _
    $region5: #{tpu_custom_call.1} parent=1 // pred_fallthru
      _
    // Predicated region
    $region6: #{tpu_custom_call.1} parent=1 // pred_check
      _
    $region7: #{tpu_custom_call.1} parent=1 // pred_check_branch
      %17 = sbr.rel (0) target = $region9
    $region8: #{tpu_custom_call.1} parent=1 // pred_region
      %s19 = ssub.s32 2048, 2048
      %20 = vsyncadd [#allocation6], %s19
      %s21 = sshll.u32 [#allocation5], 4
      %s22 = int_to_ptr.vmem [resolvable:$true] %s21
      %27 = dma.hbm_to_vmem [thread:$0]  %s2, 2048, %s22, [#allocation6], 128, 128, 8
    $region9: #{tpu_custom_call.1} parent=1 // pred_fallthru
      _
    // Predicated region
    $region10: #{tpu_custom_call.1} parent=1 // pred_check
      _
    $region11: #{tpu_custom_call.1} parent=1 // pred_check_branch
      %29 = sbr.rel (0) target = $region13
    $region12: #{tpu_custom_call.1} parent=1 // pred_region
      _
    $region13: #{tpu_custom_call.1} parent=1 // pred_fallthru
      _
    // Predicated region
    $region14: #{tpu_custom_call.1} parent=1 // pred_check
      _
    $region15: #{tpu_custom_call.1} parent=1 // pred_check_branch
      %31 = sbr.rel (0) target = $region17
    $region16: #{tpu_custom_call.1} parent=1 // pred_region
      _
    $region17: #{tpu_custom_call.1} parent=1 // pred_fallthru
      _
    // Predicated region
    $region18: #{tpu_custom_call.1} parent=1 // pred_check
      _
    $region19: #{tpu_custom_call.1} parent=1 // pred_check_branch
      %33 = sbr.rel (0) target = $region21
    $region20: #{tpu_custom_call.1} parent=1 // pred_region
      %s34 = sld [smem:[#allocation4]]
      %p35 = scmp.lt.s32.totalorder %s34, 2
      %s36 = scalar_select %p35, %s34, 2
      %s37 = smul.addr %s36, 8
      %s38 = scalar_lea.vmem %s5, %s37
      %s39 = sld [smem:[#allocation4]]
    $region21: #{tpu_custom_call.1} parent=1 // pred_fallthru
      _
    // Predicated region
    $region22: #{tpu_custom_call.1} parent=1 // pred_check
      _
    $region23: #{tpu_custom_call.1} parent=1 // pred_check_branch
      %41 = sbr.rel (0) target = $region25
    $region24: #{tpu_custom_call.1} parent=1 // pred_region
      %42 = dma.done [#allocation6], 2048
    $region25: #{tpu_custom_call.1} parent=1 // pred_fallthru
      _
    %s43 = sld [smem:[#allocation4]]
    %p44 = scmp.lt.s32.totalorder %s43, 2
    %s45 = scalar_select %p44, %s43, 2
    %s46 = smul.addr %s45, 8
    %s47 = scalar_lea.vmem %s5, %s46
    %s48 = sld [smem:[#allocation4]]
    %p49 = scmp.lt.s32.totalorder %s48, 2
    %s50 = scalar_select %p49, %s48, 2
    %s51 = smul.addr %s50, 8
    %s52 = scalar_lea.vmem %s5, %s51
    %s53 = sld [smem:[#allocation4]]
    %p54 = scmp.eq.s32.totalorder 0, 0
    // Predicated region
    $region26: #{tpu_custom_call.1} parent=1 // pred_check
      %p55 = pneg %p54
    $region27: #{tpu_custom_call.1} parent=1 // pred_check_branch
      %57 = sbr.rel (%p55) target = $region29
    $region28: #{tpu_custom_call.1} parent=1 // pred_region
      %58 = vst [vmem:[#allocation2] sm:$0xff] 0.0
      %59 = vst [vmem:[#allocation2 + $0x8] sm:$0xff] 0.0
    $region29: #{tpu_custom_call.1} parent=1 // pred_fallthru
      _
    %s60 = smul.u32 0, 128
    %s61 = sshra.s32 %s60, 7
    %s62 = sand.u32 %s60, 127
    %s63 = scalar_lea.vmem %s1, %s61
    %v64 = vld [vmem:[%s63] sm:$0xff]
    %v65 = vld [vmem:[%s63 + $0x8] sm:$0xff]
    %v66 = vld [vmem:[#allocation2] sm:$0xff]
    %v67 = vld [vmem:[#allocation2 + $0x8] sm:$0xff]
    %v68 = vld [vmem:[#allocation5] sm:$0xff]
    %v69 = vld [vmem:[#allocation5 + $0x8] sm:$0xff]
    %v70 = vld [vmem:[#allocation5 + $0x10] sm:$0xff]
    %v71 = vld [vmem:[#allocation5 + $0x18] sm:$0xff]
    %v72 = vld [vmem:[#allocation5 + $0x20] sm:$0xff]
    %v73 = vld [vmem:[#allocation5 + $0x28] sm:$0xff]
    %v74 = vld [vmem:[#allocation5 + $0x30] sm:$0xff]
    %v75 = vld [vmem:[#allocation5 + $0x38] sm:$0xff]
    %v76 = vld [vmem:[#allocation5 + $0x40] sm:$0xff]
    %v77 = vld [vmem:[#allocation5 + $0x48] sm:$0xff]
    %v78 = vld [vmem:[#allocation5 + $0x50] sm:$0xff]
    %v79 = vld [vmem:[#allocation5 + $0x58] sm:$0xff]
    %v80 = vld [vmem:[#allocation5 + $0x60] sm:$0xff]
    %v81 = vld [vmem:[#allocation5 + $0x68] sm:$0xff]
    %v82 = vld [vmem:[#allocation5 + $0x70] sm:$0xff]
    %v83 = vld [vmem:[#allocation5 + $0x78] sm:$0xff]
    %84 = vmatprep.subr.mxu0 0.0
    %85 = vmatpush1.msra.mxu0 %v68
    %86 = vmatprep.subr.mxu0 0.0
    %87 = vmatpush1.msra.mxu0 %v69
    %88 = vmatprep.subr.mxu0 0.0
    %89 = vmatpush1.msra.mxu0 %v70
    %90 = vmatprep.subr.mxu0 0.0
    %91 = vmatpush1.msra.mxu0 %v71
    %92 = vmatprep.subr.mxu0 0.0
    %93 = vmatpush1.msra.mxu0 %v72
    %94 = vmatprep.subr.mxu0 0.0
    %95 = vmatpush1.msra.mxu0 %v73
    %96 = vmatprep.subr.mxu0 0.0
    %97 = vmatpush1.msra.mxu0 %v74
    %98 = vmatprep.subr.mxu0 0.0
    %99 = vmatpush1.msra.mxu0 %v75
    %100 = vmatprep.subr.mxu0 0.0
    %101 = vmatpush1.msra.mxu0 %v76
    %102 = vmatprep.subr.mxu0 0.0
    %103 = vmatpush1.msra.mxu0 %v77
    %104 = vmatprep.subr.mxu0 0.0
    %105 = vmatpush1.msra.mxu0 %v78
    %106 = vmatprep.subr.mxu0 0.0
    %107 = vmatpush1.msra.mxu0 %v79
    %108 = vmatprep.subr.mxu0 0.0
    %109 = vmatpush1.msra.mxu0 %v80
    %110 = vmatprep.subr.mxu0 0.0
    %111 = vmatpush1.msra.mxu0 %v81
    %112 = vmatprep.subr.mxu0 0.0
    %113 = vmatpush1.msra.mxu0 %v82
    %114 = vmatprep.subr.mxu0 0.0
    %115 = vmatpush1.msra.mxu0 %v83
    %116 = vmatprep.subr.mxu0 0.0
    %117 = vmatpush1.msra.mxu0 0.0
    %118 = vmatprep.subr.mxu0 0.0
    %119 = vmatpush1.msra.mxu0 0.0
    %120 = vmatprep.subr.mxu0 0.0
    %121 = vmatpush1.msra.mxu0 0.0
    %122 = vmatprep.subr.mxu0 0.0
    %123 = vmatpush1.msra.mxu0 0.0
    %124 = vmatprep.subr.mxu0 0.0
    %125 = vmatpush1.msra.mxu0 0.0
    %126 = vmatprep.subr.mxu0 0.0
    %127 = vmatpush1.msra.mxu0 0.0
    %128 = vmatprep.subr.mxu0 0.0
    %129 = vmatpush1.msra.mxu0 0.0
    %130 = vmatprep.subr.mxu0 0.0
    %131 = vmatpush1.msra.mxu0 0.0
    %132 = vmatprep.subr.mxu0 0.0
    %133 = vmatpush1.msra.mxu0 0.0
    %134 = vmatprep.subr.mxu0 0.0
    %135 = vmatpush1.msra.mxu0 0.0
    %136 = vmatprep.subr.mxu0 0.0
    %137 = vmatpush1.msra.mxu0 0.0
    %138 = vmatprep.subr.mxu0 0.0
    %139 = vmatpush1.msra.mxu0 0.0
    %140 = vmatprep.subr.mxu0 0.0
    %141 = vmatpush1.msra.mxu0 0.0
    %142 = vmatprep.subr.mxu0 0.0
    %143 = vmatpush1.msra.mxu0 0.0
    %144 = vmatprep.subr.mxu0 0.0
    %145 = vmatpush1.msra.mxu0 0.0
    %146 = vmatprep.subr.mxu0 0.0
    %147 = vmatpush1.msra.mxu0 0.0
    %148 = vmatprep.mubr.f32.mxu0 0.0
    %149 = vmatmul.mubr.f32.gmra.mrb[0].mxu0 %v64
    %v150 = vpop.f32.mrb[0].mxu0
    %v151 = vadd.f32 0.0, %v150
    %v152 = vpop.f32.mrb[0].mxu0
    %153 = vmatprep.mubr.f32.mxu0 0.0
    %154 = vmatmul.mubr.f32.gmra.mrb[0].mxu0 %v65
    %v155 = vpop.f32.mrb[0].mxu0
    %v156 = vadd.f32 0.0, %v155
    %v157 = vpop.f32.mrb[0].mxu0
    %158 = vdwg.mxu0
    %v159 = vadd.f32 %v66, %v151
    %v160 = vadd.f32 %v67, %v156
    %161 = vst [vmem:[#allocation2] sm:$0xff] %v159
    %162 = vst [vmem:[#allocation2 + $0x8] sm:$0xff] %v160
    // Predicated region
    $region30: #{tpu_custom_call.1} parent=1 // pred_check
      %p163 = pneg %p54
    $region31: #{tpu_custom_call.1} parent=1 // pred_check_branch
      %165 = sbr.rel (%p163) target = $region33
    $region32: #{tpu_custom_call.1} parent=1 // pred_region
      %v166 = vld [vmem:[%s4] sm:$0xff]
      %v167 = vld [vmem:[%s4 + $0x8] sm:$0xff]
      %v168 = vld [vmem:[%s52] sm:$0xff]
      %vm169 = vcmask 64512
      %v171 = vsel %vm169, %v166, 0
      %v174 = vsel %vm169, %v167, 0
      %176 = vmatprep.subr.mxu0 0.0
      %177 = vmatpush1.msra.mxu0 %v168
      %178 = vmatprep.subr.mxu0 0.0
      %179 = vmatpush1.msra.mxu0 0.0
      %180 = vmatprep.subr.mxu0 0.0
      %181 = vmatpush1.msra.mxu0 0.0
      %182 = vmatprep.subr.mxu0 0.0
      %183 = vmatpush1.msra.mxu0 0.0
      %184 = vmatprep.subr.mxu0 0.0
      %185 = vmatpush1.msra.mxu0 0.0
      %186 = vmatprep.subr.mxu0 0.0
      %187 = vmatpush1.msra.mxu0 0.0
      %188 = vmatprep.subr.mxu0 0.0
      %189 = vmatpush1.msra.mxu0 0.0
      %190 = vmatprep.subr.mxu0 0.0
      %191 = vmatpush1.msra.mxu0 0.0
      %192 = vmatprep.subr.mxu0 0.0
      %193 = vmatpush1.msra.mxu0 0.0
      %194 = vmatprep.subr.mxu0 0.0
      %195 = vmatpush1.msra.mxu0 0.0
      %196 = vmatprep.subr.mxu0 0.0
      %197 = vmatpush1.msra.mxu0 0.0
      %198 = vmatprep.subr.mxu0 0.0
      %199 = vmatpush1.msra.mxu0 0.0
      %200 = vmatprep.subr.mxu0 0.0
      %201 = vmatpush1.msra.mxu0 0.0
      %202 = vmatprep.subr.mxu0 0.0
      %203 = vmatpush1.msra.mxu0 0.0
      %204 = vmatprep.subr.mxu0 0.0
      %205 = vmatpush1.msra.mxu0 0.0
      %206 = vmatprep.subr.mxu0 0.0
      %207 = vmatpush1.msra.mxu0 0.0
      %208 = vmatprep.subr.mxu0 0.0
      %209 = vmatpush1.msra.mxu0 0.0
      %210 = vmatprep.subr.mxu0 0.0
      %211 = vmatpush1.msra.mxu0 0.0
      %212 = vmatprep.subr.mxu0 0.0
      %213 = vmatpush1.msra.mxu0 0.0
      %214 = vmatprep.subr.mxu0 0.0
      %215 = vmatpush1.msra.mxu0 0.0
      %216 = vmatprep.subr.mxu0 0.0
      %217 = vmatpush1.msra.mxu0 0.0
      %218 = vmatprep.subr.mxu0 0.0
      %219 = vmatpush1.msra.mxu0 0.0
      %220 = vmatprep.subr.mxu0 0.0
      %221 = vmatpush1.msra.mxu0 0.0
      %222 = vmatprep.subr.mxu0 0.0
      %223 = vmatpush1.msra.mxu0 0.0
      %224 = vmatprep.subr.mxu0 0.0
      %225 = vmatpush1.msra.mxu0 0.0
      %226 = vmatprep.subr.mxu0 0.0
      %227 = vmatpush1.msra.mxu0 0.0
      %228 = vmatprep.subr.mxu0 0.0
      %229 = vmatpush1.msra.mxu0 0.0
      %230 = vmatprep.subr.mxu0 0.0
      %231 = vmatpush1.msra.mxu0 0.0
      %232 = vmatprep.subr.mxu0 0.0
      %233 = vmatpush1.msra.mxu0 0.0
      %234 = vmatprep.subr.mxu0 0.0
      %235 = vmatpush1.msra.mxu0 0.0
      %236 = vmatprep.subr.mxu0 0.0
      %237 = vmatpush1.msra.mxu0 0.0
      %238 = vmatprep.subr.mxu0 0.0
      %239 = vmatpush1.msra.mxu0 0.0
      %240 = vmatprep.mubr.f32.mxu0 0.0
      %241 = vmatmul.mubr.f32.gmra.mrb[0].mxu0 %v171
      %v242 = vpop.f32.mrb[0].mxu0
      %v243 = vadd.f32 0.0, %v242
      %v244 = vpop.f32.mrb[0].mxu0
      %245 = vmatprep.mubr.f32.mxu0 0.0
      %246 = vmatmul.mubr.f32.gmra.mrb[0].mxu0 %v174
      %v247 = vpop.f32.mrb[0].mxu0
      %v248 = vadd.f32 0.0, %v247
      %v249 = vpop.f32.mrb[0].mxu0
      %250 = vdwg.mxu0
      %v251 = vld [vmem:[#allocation2] sm:$0xff]
      %v252 = vld [vmem:[#allocation2 + $0x8] sm:$0xff]
      %v253 = vld [vmem:[%s3] sm:$0x1]
      %v255 = vlaneseq
      %v256 = vshrl.u32 %v255, 7
      %v257 = vsub.s32 0, %v256
      %v258 = vrot.slane %v253, %v257
      %v260 = vadd.f32 %v251, %v258
      %v261 = vadd.f32 %v252, %v258
      %v262 = vadd.f32 %v260, %v243
      %v263 = vadd.f32 %v261, %v248
      %264 = vst [vmem:[#allocation8] sm:$0xff] %v262
      %265 = vst [vmem:[#allocation8 + $0x8] sm:$0xff] %v263
    $region33: #{tpu_custom_call.1} parent=1 // pred_fallthru
      _
    // Predicated region
    $region34: #{tpu_custom_call.1} parent=1 // pred_check
      _
    $region35: #{tpu_custom_call.1} parent=1 // pred_check_branch
      %267 = sbr.rel (0) target = $region37
    $region36: #{tpu_custom_call.1} parent=1 // pred_region
      %s269 = ssub.s32 256, 256
      %270 = vsyncadd [#allocation7], %s269
      %s271 = sshll.u32 [#allocation8], 4
      %s272 = int_to_ptr.vmem [resolvable:$true] %s271
      %277 = dma.vmem_to_hbm [thread:$0]  %s272, 256, %s6, [#allocation7], 128, 128, 8
    $region37: #{tpu_custom_call.1} parent=1 // pred_fallthru
      _
    // Predicated region
    $region38: #{tpu_custom_call.1} parent=1 // pred_check
      _
    $region39: #{tpu_custom_call.1} parent=1 // pred_check_branch
      %279 = sbr.rel (0) target = $region41
    $region40: #{tpu_custom_call.1} parent=1 // pred_region
      %280 = dma.done [#allocation7], 256
    $region41: #{tpu_custom_call.1} parent=1 // pred_fallthru
      _
    %281 = vsyncpa [#allocation6], 1
    %282 = vsyncpa [#allocation7], 1

</llo_original>
